<compile_context>
chip_gen: v7x
topology: tpu7x:2x2x1
jax: 0.10.0
libtpu: 0.0.40
codegen_flags: <defaults>
</compile_context>

<pallas_src>
import math
import functools

import jax
import jax.numpy as jnp
from jax.experimental import pallas as pl
from jax.experimental.pallas import tpu as pltpu


# ----------------------------- shared numerics -------------------------------
def _layer_norm(v, gamma, beta, eps=1e-5):
    mean = jnp.mean(v, axis=-1, keepdims=True)
    var = jnp.mean(jnp.square(v - mean), axis=-1, keepdims=True)
    return (v - mean) * jax.lax.rsqrt(var + eps) * gamma + beta


# ----------------------------- Pallas kernels --------------------------------
def _passthrough_kernel(x_ref, out_ref):
    # Faithful Gated.forward: gate is forced to 0 in the source, so res == x.
    out_ref[...] = x_ref[...]


def gated_fusion_kernel(x_ref, y_ref,
                        w1x_ref, w2x_ref, w3x_ref, vhx_ref, vcx_ref,
                        w1y_ref, w2y_ref, w3y_ref, vhy_ref, vcy_ref,
                        out_ref):
    """One (tb, C) block of token rows; full gated fusion (gate NOT zeroed)."""
    x = x_ref[...].astype(jnp.float32)        # (tb, C)
    y = y_ref[...].astype(jnp.float32)        # (tb, C)

    def fc_branch(t, w1_ref, w2_ref, w3_ref, vh_ref, vc_ref):
        # FC = [Linear(C,3C), LN, ReLU, Linear(3C,3C), LN, ReLU,
        #       Linear(3C,C), LN, ReLU]  +  BatchNorm2d(C) (folded)  +  ReLU
        # vh_ref rows: [b1, ln1_g, ln1_b, b2, ln2_g, ln2_b]        shape (6, 3C)
        # vc_ref rows: [b3, ln3_g, ln3_b, bn_scale, bn_shift]      shape (5, C)
        h = jnp.dot(t, w1_ref[...], preferred_element_type=jnp.float32) + vh_ref[0:1, :]
        h = jnp.maximum(_layer_norm(h, vh_ref[1:2, :], vh_ref[2:3, :]), 0.0)
        h = jnp.dot(h, w2_ref[...], preferred_element_type=jnp.float32) + vh_ref[3:4, :]
        h = jnp.maximum(_layer_norm(h, vh_ref[4:5, :], vh_ref[5:6, :]), 0.0)
        h = jnp.dot(h, w3_ref[...], preferred_element_type=jnp.float32) + vc_ref[0:1, :]
        h = jnp.maximum(_layer_norm(h, vc_ref[1:2, :], vc_ref[2:3, :]), 0.0)
        h = h * vc_ref[3:4, :] + vc_ref[4:5, :]        # folded eval-mode BatchNorm2d
        return jnp.maximum(h, 0.0)                     # outer activation ReLU

    z1 = fc_branch(x, w1x_ref, w2x_ref, w3x_ref, vhx_ref, vcx_ref)
    z2 = fc_branch(y, w1y_ref, w2y_ref, w3y_ref, vhy_ref, vcy_ref)

    z = 1.0 / (1.0 + jnp.exp(-(z1 + z2)))              # sigmoid gate (EUP exp)
    out_ref[...] = (x * (1.0 - z) + y * z).astype(out_ref.dtype)


# ----------------------------- host-side glue --------------------------------
def pack_fc_params(p, eps=1e-5):
    """Fold BatchNorm (eval) into scale/shift and stack small vectors."""
    scale = p["bn_gamma"] / jnp.sqrt(p["bn_var"] + eps)
    shift = p["bn_beta"] - p["bn_mean"] * scale
    vec_h = jnp.stack([p["b1"], p["ln1_g"], p["ln1_b"],
                       p["b2"], p["ln2_g"], p["ln2_b"]], axis=0)       # (6, 3C)
    vec_c = jnp.stack([p["b3"], p["ln3_g"], p["ln3_b"], scale, shift], axis=0)  # (5, C)
    return (p["w1"], p["w2"], p["w3"], vec_h, vec_c)


def gated_forward(x, y, p1, p2, *, tb=128, faithful_gate_zero=True):
    """Port of Gated.forward on NCTV tensors.

    faithful_gate_zero=True  (default): mirrors the PyTorch source exactly —
        the gate is overwritten with 0, so the output equals x.  The dead FC
        branches are skipped (perf feedback: remove dead compute) and the
        result is produced by a lane-dense pass-through kernel.
    faithful_gate_zero=False: runs the full fused gated-fusion kernel
        (the presumably-intended behaviour without the `z = 0` line).
    """
    N, C, T, V = x.shape
    B = N * T * V
    x_tok = jnp.transpose(x, (0, 2, 3, 1)).reshape(B, C)       # (B, C) token rows
    y_tok = jnp.transpose(y, (0, 2, 3, 1)).reshape(B, C)

    Bp = pl.cdiv(B, tb) * tb
    if Bp != B:
        x_tok = jnp.pad(x_tok, ((0, Bp - B), (0, 0)))
        y_tok = jnp.pad(y_tok, ((0, Bp - B), (0, 0)))

    row_spec = pl.BlockSpec((tb, C), lambda i: (i, 0))
    grid = (Bp // tb,)
    cp = pltpu.CompilerParams(dimension_semantics=("parallel",))

    if faithful_gate_zero:
        # TODO(synk): the `z = 0` line in Gated.forward zeroes the gate; if the
        # gated blend is actually intended, call with faithful_gate_zero=False.
        out_tok = pl.pallas_call(
            _passthrough_kernel,
            out_shape=jax.ShapeDtypeStruct((Bp, C), x.dtype),
            grid=grid,
            in_specs=[row_spec],
            out_specs=row_spec,
            compiler_params=cp,
        )(x_tok)
    else:
        w_args = list(pack_fc_params(p1)) + list(pack_fc_params(p2))

        def full_spec(a):
            return pl.BlockSpec(a.shape, lambda i: (0,) * a.ndim)

        out_tok = pl.pallas_call(
            gated_fusion_kernel,
            out_shape=jax.ShapeDtypeStruct((Bp, C), x.dtype),
            grid=grid,
            in_specs=[row_spec, row_spec] + [full_spec(a) for a in w_args],
            out_specs=row_spec,
            compiler_params=cp,
        )(x_tok, y_tok, *w_args)

    out_tok = out_tok[:B].reshape(N, T, V, C)
    return jnp.transpose(out_tok, (0, 3, 1, 2))                # back to NCTV


# ----------------------------- parameter init --------------------------------
def init_fc_params(key, dims):
    H = 3 * dims
    ks = jax.random.split(key, 16)
    lin = lambda k, i, o: jax.random.normal(k, (i, o), jnp.float32) / math.sqrt(i)
    vec = lambda k, n, s=0.05: s * jax.random.normal(k, (n,), jnp.float32)
    return dict(
        w1=lin(ks[0], dims, H),  b1=vec(ks[1], H),
        ln1_g=1.0 + vec(ks[2], H), ln1_b=vec(ks[3], H),
        w2=lin(ks[4], H, H),     b2=vec(ks[5], H),
        ln2_g=1.0 + vec(ks[6], H), ln2_b=vec(ks[7], H),
        w3=lin(ks[8], H, dims),  b3=vec(ks[9], dims),
        ln3_g=1.0 + vec(ks[10], dims), ln3_b=vec(ks[11], dims),
        bn_gamma=1.0 + vec(ks[12], dims), bn_beta=vec(ks[13], dims),
        bn_mean=vec(ks[14], dims),
        bn_var=1.0 + 0.1 * jax.random.uniform(ks[15], (dims,), jnp.float32),
    )


# ----------------------------- pure-JAX reference ----------------------------
def _ref_fc(x_nctv, p, eps=1e-5):
    hp = jax.lax.Precision.HIGHEST
    h = jnp.transpose(x_nctv, (0, 2, 3, 1))                    # NCTV -> NTVC
    h = jnp.maximum(_layer_norm(jnp.dot(h, p["w1"], precision=hp) + p["b1"],
                                p["ln1_g"], p["ln1_b"]), 0.0)
    h = jnp.maximum(_layer_norm(jnp.dot(h, p["w2"], precision=hp) + p["b2"],
                                p["ln2_g"], p["ln2_b"]), 0.0)
    h = jnp.maximum(_layer_norm(jnp.dot(h, p["w3"], precision=hp) + p["b3"],
                                p["ln3_g"], p["ln3_b"]), 0.0)
    h = jnp.transpose(h, (0, 3, 1, 2))                         # back to NCTV
    inv = jax.lax.rsqrt(p["bn_var"] + eps)
    h = (h - p["bn_mean"][None, :, None, None]) * (inv * p["bn_gamma"])[None, :, None, None] \
        + p["bn_beta"][None, :, None, None]
    return jnp.maximum(h, 0.0)                                 # act ReLU; dropout = identity


def _ref_gated(x, y, p1, p2, *, gate_zero=True):
    z1 = _ref_fc(x, p1)
    z2 = _ref_fc(y, p2)
    z = jax.nn.sigmoid(z1 + z2)
    if gate_zero:                        # mirrors the literal `z = 0` in the source
        z = jnp.zeros_like(z)
    return x * (1.0 - z) + y * z


# ----------------------------------- main -------------------------------------
if __name__ == "__main__":
    # Small shapes consistent with the module: dims=C=128 (lane-dense), hidden=3*C=384.
    N, C, T, V = 2, 128, 16, 16          # N*T*V = 512 token rows
    key = jax.random.PRNGKey(0)
    kx, ky, k1, k2 = jax.random.split(key, 4)
    x = jax.random.normal(kx, (N, C, T, V), jnp.float32)
    y = jax.random.normal(ky, (N, C, T, V), jnp.float32)
    p1 = init_fc_params(k1, C)
    p2 = init_fc_params(k2, C)

    # 1) Faithful forward: the source's `z = 0` makes the module return x.
    out_faithful = jax.block_until_ready(gated_forward(x, y, p1, p2))
    assert out_faithful.shape == (N, C, T, V)
    assert jnp.allclose(out_faithful, _ref_gated(x, y, p1, p2, gate_zero=True)), \
        "faithful path mismatch"

    # 2) Full fused gated-fusion kernel (intended math, gate not zeroed).
    out_fused = jax.block_until_ready(
        gated_forward(x, y, p1, p2, tb=128, faithful_gate_zero=False))
    ref = _ref_gated(x, y, p1, p2, gate_zero=False)
    max_err = float(jnp.max(jnp.abs(out_fused - ref)))
    assert out_fused.shape == (N, C, T, V)
    assert jnp.allclose(out_fused, ref, atol=5e-3, rtol=5e-3), f"max abs err {max_err}"

    print("KERNEL_OK")
</pallas_src>

<mosaic_0001>
module attributes {stable_mosaic.version = 11 : i64} {
  func.func @_passthrough_kernel(%arg0: i32, %arg1: memref<128x128xf32, #tpu.memory_space<vmem>>, %arg2: memref<128x128xf32, #tpu.memory_space<vmem>>) attributes {dimension_semantics = [#tpu.dimension_semantics<parallel>], iteration_bounds = array<i64: 4>, scalar_prefetch = 0 : i64, scratch_operands = 0 : i64, tpu.core_type = #tpu.core_type<tc>, window_params = [{transform_indices = @transform_0, window_bounds = array<i64: 128, 128>}, {transform_indices = @transform_1, window_bounds = array<i64: 128, 128>}]} {
    %c0 = arith.constant 0 : index
    %c0_0 = arith.constant 0 : index
    %0 = vector.load %arg1[%c0, %c0_0] : memref<128x128xf32, #tpu.memory_space<vmem>>, vector<128x128xf32>
    %c0_1 = arith.constant 0 : index
    %c0_2 = arith.constant 0 : index
    %1 = vector.load %arg2[%c0_1, %c0_2] : memref<128x128xf32, #tpu.memory_space<vmem>>, vector<128x128xf32>
    tpu.vector_store %arg2[%c0_1, %c0_2], %0 {strides = array<i32>} : memref<128x128xf32, #tpu.memory_space<vmem>>, vector<128x128xf32>,
    return
  }
  func.func @transform_0(%arg0: i32) -> (i32, i32) {
    %c0_i32 = arith.constant 0 : i32
    %c0_i32_0 = arith.constant 0 : i32
    return %arg0, %c0_i32 : i32, i32
  }
  func.func @transform_1(%arg0: i32) -> (i32, i32) {
    %c0_i32 = arith.constant 0 : i32
    %c0_i32_0 = arith.constant 0 : i32
    return %arg0, %c0_i32 : i32, i32
  }
}

</mosaic_0001>

<llo_original>
// kernel: tpu_custom_call.1
$region0: #{tpu_custom_call.1}
  #allocation0 [shape = 'u32[]', space=smem, size = 0x4, offset = 0x4, fixed_abs, tag = 'smem constant byte address 0x4 - core index']
  #allocation1 [shape = 'u32[144,128]{1,0:T(1,128)}', space=vmem, size = 0x12000, scoped, tag = 'internal scratch']
  %s0 = inlined_call_operand.hbm [shape: f32[512,128], index: 0, kind: input, shape index: {}]
  %s1 = inlined_call_operand.hbm [shape: f32[512,128], index: 1, kind: output, shape index: {}]
  %s2 = sld [smem:[#allocation0]]
  $region41: #{tpu_custom_call.1} parent=0
    _
  %s4 = ssub.s32 1, %s2
  %s5 = scalar_select 0, %s4, %s2
  $region1: #{tpu_custom_call.1} parent=0
    #allocation2 [shape = 'u8[131072]{0}', space=vmem, size = 0x20000, scoped, tag = 'input window, operand 0']
    #allocation3 [shape = 's32[2]{0}', space=sflag, size = 0x8, scoped, tag = 'scoped memory for tpu_custom_call.1']
    #allocation4 [shape = 's32[2]{0}', space=sflag, size = 0x8, scoped, tag = 'scoped memory for tpu_custom_call.1']
    #allocation5 [shape = 'u8[131072]{0}', space=vmem, size = 0x20000, scoped, tag = 'output window, operand 0']
    %6 = vsyncpa [#allocation3], 0
    %s7 = scalar_lea.sflag [#allocation3], 1
    %8 = vsyncpa %s7, 0
    %9 = vsyncpa [#allocation4], 0
    %s10 = scalar_lea.sflag [#allocation4], 1
    %11 = vsyncpa %s10, 0
    loop: start=0, step=1, limit=6
    $region2: #{tpu_custom_call.1} parent=1 // loop_pre_header
      _
    $region3: #{tpu_custom_call.1} parent=1 // loop_header
      %s13 = sphi 0, %s17
      %p14 = scmp.ge.s32.totalorder %s13, 6
      %s23 = sphi 0, %s25
      %s26 = sphi 0, %s23
      %s27 = sphi 0, %s26
      %s43 = sphi 0, %s27
      %s49 = sphi 0, %s51
      %s52 = sphi 0, %s49
      %s53 = sphi 0, %s52
      %s69 = sphi 0, %s53
    $region4: #{tpu_custom_call.1} parent=1 // loop_header_branch
      %16 = sbr.rel (%p14) target = $region8
    $region5: #{tpu_custom_call.1} parent=1 // loop_body
      %s18 = ssub.s32 %s13, 1
      %s19 = ssub.s32 %s13, 2
      %s20 = sadd.s32 %s13, 1
      %s21 = ssub.s32 %s13, %s20
      %p22 = scmp.eq.s32.totalorder %s21, 0
      %s24 = sadd.s32 %s23, 1
      %s25 = scalar_select %p22, %s23, %s24
      %p28 = pneg %p22
      %p29 = scmp.eq.s32.totalorder %s13, 3
      %p30 = por %p28, %p29
      %p31 = scmp.ne.s32.totalorder %s23, %s26
      %p32 = scmp.eq.s32.totalorder %s13, 0
      %p33 = por %p31, %p32
      %p34 = scmp.ne.s32.totalorder %s23, %s26
      %p35 = scmp.eq.s32.totalorder %s18, 3
      %p36 = por %p34, %p35
      %p37 = scmp.ne.s32.totalorder %s26, %s27
      %p38 = scmp.eq.s32.totalorder %s18, 0
      %p39 = por %p37, %p38
      %p40 = scmp.ne.s32.totalorder %s26, %s27
      %p41 = scmp.eq.s32.totalorder %s19, 3
      %p42 = por %p40, %p41
      %p44 = scmp.ne.s32.totalorder %s27, %s43
      %p45 = scmp.eq.s32.totalorder %s19, 0
      %p46 = por %p44, %p45
      %s47 = ssub.s32 %s13, %s20
      %p48 = scmp.eq.s32.totalorder %s47, 0
      %s50 = sadd.s32 %s49, 1
      %s51 = scalar_select %p48, %s49, %s50
      %p54 = pneg %p48
      %p55 = scmp.eq.s32.totalorder %s13, 3
      %p56 = por %p54, %p55
      %p57 = scmp.ne.s32.totalorder %s49, %s52
      %p58 = scmp.eq.s32.totalorder %s13, 0
      %p59 = por %p57, %p58
      %p60 = scmp.ne.s32.totalorder %s49, %s52
      %p61 = scmp.eq.s32.totalorder %s18, 3
      %p62 = por %p60, %p61
      %p63 = scmp.ne.s32.totalorder %s52, %s53
      %p64 = scmp.eq.s32.totalorder %s18, 0
      %p65 = por %p63, %p64
      %p66 = scmp.ne.s32.totalorder %s52, %s53
      %p67 = scmp.eq.s32.totalorder %s19, 3
      %p68 = por %p66, %p67
      %p70 = scmp.ne.s32.totalorder %s53, %s69
      %p71 = scmp.eq.s32.totalorder %s19, 0
      %p72 = por %p70, %p71
      %p73 = scmp.le.s32.totalorder 1, %s13
      %p74 = scmp.lt.s32.totalorder %s13, 5
      %p75 = pnand %p73, %p74
      %p76 = pneg %p75
      // Predicated region
      $region9: #{tpu_custom_call.1} parent=5 // pred_check
        _
      $region10: #{tpu_custom_call.1} parent=5 // pred_check_branch
        %78 = sbr.rel (%p75) target = $region12
      $region11: #{tpu_custom_call.1} parent=5 // pred_region
        %s79 = ssub.s32 %s13, 1
      $region12: #{tpu_custom_call.1} parent=5 // pred_fallthru
        _
      %p80 = scmp.lt.s32.totalorder %s13, 4
      // Predicated region
      $region13: #{tpu_custom_call.1} parent=5 // pred_check
        %p81 = pneg %p80
      $region14: #{tpu_custom_call.1} parent=5 // pred_check_branch
        %83 = sbr.rel (%p81) target = $region16
      $region15: #{tpu_custom_call.1} parent=5 // pred_region
        // Predicated region
        $region17: #{tpu_custom_call.1} parent=15 // pred_check
          %p84 = pneg %p33
        $region18: #{tpu_custom_call.1} parent=15 // pred_check_branch
          %86 = sbr.rel (%p84) target = $region20
        $region19: #{tpu_custom_call.1} parent=15 // pred_region
          %s87 = sand.u32 %s23, 1
          %s88 = scalar_lea.sflag [#allocation3], %s87
          %s89 = sand.u32 %s23, 1
          %s90 = smul.addr %s89, 128
          %s91 = scalar_lea.vmem [#allocation2], %s90
          %s92 = smul.u32 16, %s13
          %s94 = ssub.s32 2048, 2048
          %95 = vsyncadd %s88, %s94
          %s96 = smul.addr %s92, 128
          %s97 = scalar_lea.hbm %s0, %s96
          %s98 = sshll.u32 %s91, 4
          %s99 = int_to_ptr.vmem [resolvable:$true] %s98
          %104 = dma.hbm_to_vmem [thread:$0]  %s97, 2048, %s99, %s88, 128, 128, 8
        $region20: #{tpu_custom_call.1} parent=15 // pred_fallthru
          _
      $region16: #{tpu_custom_call.1} parent=5 // pred_fallthru
        _
      %p105 = scmp.le.s32.totalorder 1, %s13
      %p106 = scmp.lt.s32.totalorder %s13, 5
      %p107 = pnand %p105, %p106
      %p108 = pneg %p107
      // Predicated region
      $region21: #{tpu_custom_call.1} parent=5 // pred_check
        _
      $region22: #{tpu_custom_call.1} parent=5 // pred_check_branch
        %110 = sbr.rel (%p107) target = $region24
      $region23: #{tpu_custom_call.1} parent=5 // pred_region
        %s111 = ssub.s32 %s13, 1
        %s112 = sand.u32 %s26, 1
        %s113 = scalar_lea.sflag [#allocation3], %s112
        %s114 = sand.u32 %s26, 1
        %s115 = smul.addr %s114, 128
        %s116 = scalar_lea.vmem [#allocation2], %s115
        // Predicated region
        $region25: #{tpu_custom_call.1} parent=23 // pred_check
          %p117 = pneg %p39
        $region26: #{tpu_custom_call.1} parent=23 // pred_check_branch
          %119 = sbr.rel (%p117) target = $region28
        $region27: #{tpu_custom_call.1} parent=23 // pred_region
          %120 = dma.done %s113, 2048
        $region28: #{tpu_custom_call.1} parent=23 // pred_fallthru
          _
        %s121 = sand.u32 %s26, 1
        %s122 = scalar_lea.sflag [#allocation3], %s121
        %s123 = sand.u32 %s26, 1
        %s124 = smul.addr %s123, 128
        %s125 = scalar_lea.vmem [#allocation2], %s124
        %p126 = pneg %p39
        %p127 = pneg %p36
        %p128 = pneg %p65
        %p129 = pneg %p62
        %s130 = sand.u32 %s52, 1
        %s131 = scalar_lea.sflag [#allocation4], %s130
        %s132 = sand.u32 %s52, 1
        %s133 = smul.addr %s132, 128
        %s134 = scalar_lea.vmem [#allocation5], %s133
        %s135 = smul.u32 16, %s18
        %s136 = smul.u32 16, %s18
        %v137 = vld [vmem:[%s116] sm:$0xff]
        %v138 = vld [vmem:[%s116 + $0x8] sm:$0xff]
        %v139 = vld [vmem:[%s116 + $0x10] sm:$0xff]
        %v140 = vld [vmem:[%s116 + $0x18] sm:$0xff]
        %v141 = vld [vmem:[%s116 + $0x20] sm:$0xff]
        %v142 = vld [vmem:[%s116 + $0x28] sm:$0xff]
        %v143 = vld [vmem:[%s116 + $0x30] sm:$0xff]
        %v144 = vld [vmem:[%s116 + $0x38] sm:$0xff]
        %v145 = vld [vmem:[%s116 + $0x40] sm:$0xff]
        %v146 = vld [vmem:[%s116 + $0x48] sm:$0xff]
        %v147 = vld [vmem:[%s116 + $0x50] sm:$0xff]
        %v148 = vld [vmem:[%s116 + $0x58] sm:$0xff]
        %v149 = vld [vmem:[%s116 + $0x60] sm:$0xff]
        %v150 = vld [vmem:[%s116 + $0x68] sm:$0xff]
        %v151 = vld [vmem:[%s116 + $0x70] sm:$0xff]
        %v152 = vld [vmem:[%s116 + $0x78] sm:$0xff]
        %153 = vst [vmem:[%s134] sm:$0xff] %v137
        %154 = vst [vmem:[%s134 + $0x8] sm:$0xff] %v138
        %155 = vst [vmem:[%s134 + $0x10] sm:$0xff] %v139
        %156 = vst [vmem:[%s134 + $0x18] sm:$0xff] %v140
        %157 = vst [vmem:[%s134 + $0x20] sm:$0xff] %v141
        %158 = vst [vmem:[%s134 + $0x28] sm:$0xff] %v142
        %159 = vst [vmem:[%s134 + $0x30] sm:$0xff] %v143
        %160 = vst [vmem:[%s134 + $0x38] sm:$0xff] %v144
        %161 = vst [vmem:[%s134 + $0x40] sm:$0xff] %v145
        %162 = vst [vmem:[%s134 + $0x48] sm:$0xff] %v146
        %163 = vst [vmem:[%s134 + $0x50] sm:$0xff] %v147
        %164 = vst [vmem:[%s134 + $0x58] sm:$0xff] %v148
        %165 = vst [vmem:[%s134 + $0x60] sm:$0xff] %v149
        %166 = vst [vmem:[%s134 + $0x68] sm:$0xff] %v150
        %167 = vst [vmem:[%s134 + $0x70] sm:$0xff] %v151
        %168 = vst [vmem:[%s134 + $0x78] sm:$0xff] %v152
        %s169 = sand.u32 %s52, 1
        %s170 = scalar_lea.sflag [#allocation4], %s169
        %s171 = sand.u32 %s52, 1
        %s172 = smul.addr %s171, 128
        %s173 = scalar_lea.vmem [#allocation5], %s172
        // Predicated region
        $region29: #{tpu_custom_call.1} parent=23 // pred_check
          %p174 = pneg %p62
        $region30: #{tpu_custom_call.1} parent=23 // pred_check_branch
          %176 = sbr.rel (%p174) target = $region32
        $region31: #{tpu_custom_call.1} parent=23 // pred_region
          %s177 = smul.u32 16, %s18
          %s179 = ssub.s32 2048, 2048
          %180 = vsyncadd %s170, %s179
          %s181 = smul.addr %s177, 128
          %s182 = scalar_lea.hbm %s1, %s181
          %s183 = sshll.u32 %s173, 4
          %s184 = int_to_ptr.vmem [resolvable:$true] %s183
          %189 = dma.vmem_to_hbm [thread:$0]  %s184, 2048, %s182, %s170, 128, 128, 8
        $region32: #{tpu_custom_call.1} parent=23 // pred_fallthru
          _
      $region24: #{tpu_custom_call.1} parent=5 // pred_fallthru
        _
      %p190 = scmp.le.s32.totalorder 2, %s13
      // Predicated region
      $region33: #{tpu_custom_call.1} parent=5 // pred_check
        %p191 = pneg %p190
      $region34: #{tpu_custom_call.1} parent=5 // pred_check_branch
        %193 = sbr.rel (%p191) target = $region36
      $region35: #{tpu_custom_call.1} parent=5 // pred_region
        %s194 = ssub.s32 %s13, 2
        // Predicated region
        $region37: #{tpu_custom_call.1} parent=35 // pred_check
          %p195 = pneg %p68
        $region38: #{tpu_custom_call.1} parent=35 // pred_check_branch
          %197 = sbr.rel (%p195) target = $region40
        $region39: #{tpu_custom_call.1} parent=35 // pred_region
          %s198 = sand.u32 %s53, 1
          %s199 = scalar_lea.sflag [#allocation4], %s198
          %s200 = sand.u32 %s53, 1
          %s201 = smul.addr %s200, 128
          %s202 = scalar_lea.vmem [#allocation5], %s201
          %203 = dma.done %s199, 2048
        $region40: #{tpu_custom_call.1} parent=35 // pred_fallthru
          _
      $region36: #{tpu_custom_call.1} parent=5 // pred_fallthru
        _
    $region6: #{tpu_custom_call.1} parent=1 // loop_footer
      %s17 = sadd.s32 1, %s13
    $region7: #{tpu_custom_call.1} parent=1 // loop_footer_branch
      %12 = sbr.rel target = $region3
    $region8: #{tpu_custom_call.1} parent=1 // loop_exit
      _
    %204 = vsyncpa [#allocation3], 1
    %s205 = scalar_lea.sflag [#allocation3], 1
    %206 = vsyncpa %s205, 1
    %207 = vsyncpa [#allocation4], 1
    %s208 = scalar_lea.sflag [#allocation4], 1
    %209 = vsyncpa %s208, 1

</llo_original>
